<compile_context>
chip_gen: v7x
topology: tpu7x:2x2x1
jax: 0.10.0
libtpu: 0.0.40
codegen_flags: <defaults>
</compile_context>

<pallas_src>
import functools

import jax
import jax.numpy as jnp
from jax import lax
from jax.experimental import pallas as pl
from jax.experimental.pallas import tpu as pltpu


def _pooling_kernel(x_ref, o_ref, *, channels, pool_size):
    """One grid step on a (TB, H, W*C) lane-dense block."""
    c = channels
    p = pool_size // 2
    f32 = jnp.float32

    x_in = x_ref[...]                      # native dtype (bf16 rolls stay bf16)
    _, h, wc = x_in.shape
    y = x_in.astype(f32)                   # f32 accumulation (matches AvgPool2d)

    row = lax.broadcasted_iota(jnp.int32, (1, h, 1), 1)    # sublane index
    col = lax.broadcasted_iota(jnp.int32, (1, 1, wc), 2)   # lane index

    # ---- vertical k-tap sum (H axis: sublane rotate by d, wrapped rows masked) ----
    v = y
    rcnt = 1.0
    for d in range(1, p + 1):
        m_prev = (row >= d).astype(f32)          # rows that have a valid row d above
        m_next = (row < h - d).astype(f32)       # rows that have a valid row d below
        v = v + pltpu.roll(x_in, d % h, axis=1).astype(f32) * m_prev
        v = v + pltpu.roll(x_in, (h - d) % h, axis=1).astype(f32) * m_next
        rcnt = rcnt + m_prev + m_next
    v = v * (1.0 / rcnt)                         # (1,H,1) broadcast, exact divide

    # ---- horizontal k-tap sum (W axis == lane rotate by d*C, wrapped lanes masked) ----
    s = v
    ccnt = 1.0
    for d in range(1, p + 1):
        m_prev = (col >= d * c).astype(f32)
        m_next = (col < wc - d * c).astype(f32)
        s = s + pltpu.roll(v, (d * c) % wc, axis=2) * m_prev
        s = s + pltpu.roll(v, (wc - d * c) % wc, axis=2) * m_next
        ccnt = ccnt + m_prev + m_next
    s = s * (1.0 / ccnt)                         # (1,1,WC) broadcast, exact divide

    # count_include_pad=False average minus input (PoolFormer residual).
    o_ref[...] = (s - y).astype(o_ref.dtype)


def _tpu_params():
    """(vmem_capacity_bytes, num_tensorcores) with safe fallbacks."""
    vmem = 64 * 1024 * 1024            # conservative default, valid on v5e/v6e/v7x
    cores = 1
    try:
        info = pltpu.get_tpu_info()
        vmem = int(getattr(info, "vmem_capacity_bytes", vmem))
        for name in ("num_cores", "core_count", "tensorcore_count", "num_tensorcores"):
            val = getattr(info, name, None)
            if isinstance(val, int) and val > 0:
                cores = val
                break
    except Exception:
        pass
    return vmem, cores


def pooling(x, *, pool_size=3):
    """Pallas equivalent of Pooling.forward for NHWC input x."""
    assert pool_size % 2 == 1, "pool_size must be odd (stride=1, 'same' padding)"
    B, H, W, C = x.shape
    WC = W * C

    # Free, layout-preserving fold: C stays minormost, lane dim becomes W*C.
    xf = x.reshape(B, H, WC)

    vmem_cap, num_cores = _tpu_params()
    # Generation-aware VMEM limit: physical capacity minus headroom (so it is
    # valid on v7x's 64 MiB VMEM), never above 100 MiB on v5e/v6e.
    vmem_limit = int(min(max(vmem_cap - 16 * 1024 * 1024, 32 * 1024 * 1024),
                         100 * 1024 * 1024))

    # Batch-block sizing: ~8 MiB f32 working set per step, capped so the
    # per-step VMEM need (2x in + 2x out double buffers + ~5 live f32
    # intermediates) fits in the limit with slack.
    image_f32_bytes = H * WC * 4
    per_image_step_bytes = 4 * H * WC * x.dtype.itemsize + 5 * image_f32_bytes
    tb_target = max(1, (8 * 1024 * 1024) // image_f32_bytes)
    tb_vmem = max(1, int(0.8 * vmem_limit) // max(per_image_step_bytes, 1))
    TB = max(1, min(B, tb_target, tb_vmem))
    if num_cores >= 2 and B >= 2:
        # Only split blocks for megacore sharding when there really are >=2 TCs.
        TB = min(TB, pl.cdiv(B, num_cores))

    # Ragged batch: pad B up to a multiple of TB instead of shrinking TB to 1.
    n_steps = pl.cdiv(B, TB)
    Bp = n_steps * TB
    if Bp != B:
        xf = jnp.pad(xf, ((0, Bp - B), (0, 0), (0, 0)))

    # TODO(synk): very large single images (per-image working set >> vmem_limit)
    # would additionally need an H-tiling grid axis with a p-row halo.

    kernel = functools.partial(_pooling_kernel, channels=C, pool_size=pool_size)
    out = pl.pallas_call(
        kernel,
        out_shape=jax.ShapeDtypeStruct((Bp, H, WC), x.dtype),
        grid_spec=pltpu.PrefetchScalarGridSpec(
            num_scalar_prefetch=0,
            grid=(n_steps,),
            in_specs=[pl.BlockSpec((TB, H, WC), lambda b: (b, 0, 0))],
            out_specs=pl.BlockSpec((TB, H, WC), lambda b: (b, 0, 0)),
        ),
        compiler_params=pltpu.CompilerParams(
            dimension_semantics=("parallel",),
            vmem_limit_bytes=vmem_limit),
    )(xf)
    if Bp != B:
        out = out[:B]
    return out.reshape(B, H, W, C)


def _reference(x, pool_size=3):
    """Independent pure-JAX reference (count_include_pad=False avg pool)."""
    k = pool_size
    xf = x.astype(jnp.float32)
    s = lax.reduce_window(xf, 0.0, lax.add, (1, k, k, 1), (1, 1, 1, 1), "SAME")
    cnt = lax.reduce_window(jnp.ones(x.shape, jnp.float32), 0.0, lax.add,
                            (1, k, k, 1), (1, 1, 1, 1), "SAME")
    return (s / cnt - xf).astype(x.dtype)


if __name__ == "__main__":
    key0, key1 = jax.random.split(jax.random.PRNGKey(0))
    pool_fn = jax.jit(pooling)

    # PoolFormer stage-1-like small shape (C=64 exercises the lane-dense fold).
    B, H, W, C = 2, 16, 16, 64
    x = jax.random.normal(key0, (B, H, W, C), dtype=jnp.float32)
    out = jax.block_until_ready(pool_fn(x))
    assert out.shape == x.shape and out.dtype == x.dtype
    assert jnp.allclose(out, _reference(x), atol=1e-5, rtol=1e-5)

    # Ragged / odd batch exercises the pad-to-multiple-of-TB path.
    x2 = jax.random.normal(key1, (3, 8, 8, 32), dtype=jnp.float32)
    out2 = jax.block_until_ready(pool_fn(x2))
    assert jnp.allclose(out2, _reference(x2), atol=1e-5, rtol=1e-5)

    print("KERNEL_OK")
</pallas_src>

<mosaic_0001>
module attributes {stable_mosaic.version = 11 : i64} {
  func.func @_pooling_kernel(%arg0: i32, %arg1: memref<2x16x1024xf32, #tpu.memory_space<vmem>>, %arg2: memref<2x16x1024xf32, #tpu.memory_space<vmem>>) attributes {dimension_semantics = [#tpu.dimension_semantics<parallel>], iteration_bounds = array<i64: 1>, scalar_prefetch = 0 : i64, scratch_operands = 0 : i64, tpu.core_type = #tpu.core_type<tc>, window_params = [{transform_indices = @transform_0, window_bounds = array<i64: 2, 16, 1024>}, {transform_indices = @transform_1, window_bounds = array<i64: 2, 16, 1024>}]} {
    %c0 = arith.constant 0 : index
    %c0_0 = arith.constant 0 : index
    %c0_1 = arith.constant 0 : index
    %0 = vector.load %arg1[%c0, %c0_0, %c0_1] : memref<2x16x1024xf32, #tpu.memory_space<vmem>>, vector<2x16x1024xf32>
    %1 = tpu.iota {dimensions = array<i32: 1>} : vector<1x16x1xi32>
    %2 = tpu.iota {dimensions = array<i32: 2>} : vector<1x1x1024xi32>
    %c1_i32 = arith.constant 1 : i32
    %3 = vector.broadcast %c1_i32 : i32 to vector<1x16x1xi32>
    %4 = arith.cmpi sge, %1, %3 : vector<1x16x1xi32>
    %5 = arith.extui %4 : vector<1x16x1xi1> to vector<1x16x1xi32>
    %6 = arith.sitofp %5 : vector<1x16x1xi32> to vector<1x16x1xf32>
    %c15_i32 = arith.constant 15 : i32
    %7 = vector.broadcast %c15_i32 : i32 to vector<1x16x1xi32>
    %8 = arith.cmpi slt, %1, %7 : vector<1x16x1xi32>
    %9 = arith.extui %8 : vector<1x16x1xi1> to vector<1x16x1xi32>
    %10 = arith.sitofp %9 : vector<1x16x1xi32> to vector<1x16x1xf32>
    %c1_i32_2 = arith.constant 1 : i32
    %11 = tpu.dynamic_rotate %0 by %c1_i32_2 dim 1 : vector<2x16x1024xf32>, i32 -> vector<2x16x1024xf32>
    %12 = vector.broadcast %6 : vector<1x16x1xf32> to vector<2x16x1024xf32>
    %13 = arith.mulf %11, %12 : vector<2x16x1024xf32>
    %14 = arith.addf %0, %13 : vector<2x16x1024xf32>
    %c15_i32_3 = arith.constant 15 : i32
    %15 = tpu.dynamic_rotate %0 by %c15_i32_3 dim 1 : vector<2x16x1024xf32>, i32 -> vector<2x16x1024xf32>
    %16 = vector.broadcast %10 : vector<1x16x1xf32> to vector<2x16x1024xf32>
    %17 = arith.mulf %15, %16 : vector<2x16x1024xf32>
    %18 = arith.addf %14, %17 : vector<2x16x1024xf32>
    %cst = arith.constant 1.000000e+00 : f32
    %19 = vector.broadcast %cst : f32 to vector<1x16x1xf32>
    %20 = arith.addf %19, %6 : vector<1x16x1xf32>
    %21 = arith.addf %20, %10 : vector<1x16x1xf32>
    %cst_4 = arith.constant 1.000000e+00 : f32
    %22 = vector.broadcast %cst_4 : f32 to vector<1x16x1xf32>
    %23 = arith.divf %22, %21 : vector<1x16x1xf32>
    %24 = vector.broadcast %23 : vector<1x16x1xf32> to vector<2x16x1024xf32>
    %25 = arith.mulf %18, %24 : vector<2x16x1024xf32>
    %c64_i32 = arith.constant 64 : i32
    %26 = vector.broadcast %c64_i32 : i32 to vector<1x1x1024xi32>
    %27 = arith.cmpi sge, %2, %26 : vector<1x1x1024xi32>
    %28 = arith.extui %27 : vector<1x1x1024xi1> to vector<1x1x1024xi32>
    %29 = arith.sitofp %28 : vector<1x1x1024xi32> to vector<1x1x1024xf32>
    %c960_i32 = arith.constant 960 : i32
    %30 = vector.broadcast %c960_i32 : i32 to vector<1x1x1024xi32>
    %31 = arith.cmpi slt, %2, %30 : vector<1x1x1024xi32>
    %32 = arith.extui %31 : vector<1x1x1024xi1> to vector<1x1x1024xi32>
    %33 = arith.sitofp %32 : vector<1x1x1024xi32> to vector<1x1x1024xf32>
    %c64_i32_5 = arith.constant 64 : i32
    %34 = tpu.dynamic_rotate %25 by %c64_i32_5 dim 2 : vector<2x16x1024xf32>, i32 -> vector<2x16x1024xf32>
    %35 = vector.broadcast %29 : vector<1x1x1024xf32> to vector<2x16x1024xf32>
    %36 = arith.mulf %34, %35 : vector<2x16x1024xf32>
    %37 = arith.addf %25, %36 : vector<2x16x1024xf32>
    %c960_i32_6 = arith.constant 960 : i32
    %38 = tpu.dynamic_rotate %25 by %c960_i32_6 dim 2 : vector<2x16x1024xf32>, i32 -> vector<2x16x1024xf32>
    %39 = vector.broadcast %33 : vector<1x1x1024xf32> to vector<2x16x1024xf32>
    %40 = arith.mulf %38, %39 : vector<2x16x1024xf32>
    %41 = arith.addf %37, %40 : vector<2x16x1024xf32>
    %cst_7 = arith.constant 1.000000e+00 : f32
    %42 = vector.broadcast %cst_7 : f32 to vector<1x1x1024xf32>
    %43 = arith.addf %42, %29 : vector<1x1x1024xf32>
    %44 = arith.addf %43, %33 : vector<1x1x1024xf32>
    %cst_8 = arith.constant 1.000000e+00 : f32
    %45 = vector.broadcast %cst_8 : f32 to vector<1x1x1024xf32>
    %46 = arith.divf %45, %44 : vector<1x1x1024xf32>
    %47 = vector.broadcast %46 : vector<1x1x1024xf32> to vector<2x16x1024xf32>
    %48 = arith.mulf %41, %47 : vector<2x16x1024xf32>
    %49 = arith.subf %48, %0 : vector<2x16x1024xf32>
    %c0_9 = arith.constant 0 : index
    %c0_10 = arith.constant 0 : index
    %c0_11 = arith.constant 0 : index
    %50 = vector.load %arg2[%c0_9, %c0_10, %c0_11] : memref<2x16x1024xf32, #tpu.memory_space<vmem>>, vector<2x16x1024xf32>
    tpu.vector_store %arg2[%c0_9, %c0_10, %c0_11], %49 {strides = array<i32>} : memref<2x16x1024xf32, #tpu.memory_space<vmem>>, vector<2x16x1024xf32>,
    return
  }
  func.func @transform_0(%arg0: i32) -> (i32, i32, i32) {
    %c0_i32 = arith.constant 0 : i32
    %c0_i32_0 = arith.constant 0 : i32
    %c0_i32_1 = arith.constant 0 : i32
    return %arg0, %c0_i32, %c0_i32_0 : i32, i32, i32
  }
  func.func @transform_1(%arg0: i32) -> (i32, i32, i32) {
    %c0_i32 = arith.constant 0 : i32
    %c0_i32_0 = arith.constant 0 : i32
    %c0_i32_1 = arith.constant 0 : i32
    return %arg0, %c0_i32, %c0_i32_0 : i32, i32, i32
  }
}

</mosaic_0001>

<llo_original>
// kernel: pooling.1
$region0: #{pooling.1}
  #allocation0 [shape = 'u32[]', space=smem, size = 0x4, offset = 0x4, fixed_abs, tag = 'smem constant byte address 0x4 - core index']
  #allocation1 [shape = 'u32[144,128]{1,0:T(1,128)}', space=vmem, size = 0x12000, scoped, tag = 'internal scratch']
  %s0 = inlined_call_operand.vmem [shape: f32[2,16,1024], index: 0, kind: input, shape index: {}]
  %s1 = inlined_call_operand.vmem [shape: f32[2,16,1024], index: 1, kind: output, shape index: {}]
  %s2 = sld [smem:[#allocation0]]
  $region14: #{pooling.1} parent=0
    _
  %s4 = ssub.s32 1, %s2
  %s5 = scalar_select 0, %s4, %s2
  // Predicated region
  $region2: #{pooling.1} parent=0 // pred_check
    _
  $region3: #{pooling.1} parent=0 // pred_check_branch
    %7 = sbr.rel (0) target = $region5
  $region4: #{pooling.1} parent=0 // pred_region
    _
  $region5: #{pooling.1} parent=0 // pred_fallthru
    _
  %v8 = vld [vmem:[%s0] sm:$0xff]
  %v9 = vld [vmem:[%s0 + $0x8] sm:$0xff]
  %v10 = vld [vmem:[%s0 + $0x10] sm:$0xff]
  %v11 = vld [vmem:[%s0 + $0x18] sm:$0xff]
  %v12 = vld [vmem:[%s0 + $0x20] sm:$0xff]
  %v13 = vld [vmem:[%s0 + $0x28] sm:$0xff]
  %v14 = vld [vmem:[%s0 + $0x30] sm:$0xff]
  %v15 = vld [vmem:[%s0 + $0x38] sm:$0xff]
  %v16 = vld [vmem:[%s0 + $0x40] sm:$0xff]
  %v17 = vld [vmem:[%s0 + $0x48] sm:$0xff]
  %v18 = vld [vmem:[%s0 + $0x50] sm:$0xff]
  %v19 = vld [vmem:[%s0 + $0x58] sm:$0xff]
  %v20 = vld [vmem:[%s0 + $0x60] sm:$0xff]
  %v21 = vld [vmem:[%s0 + $0x68] sm:$0xff]
  %v22 = vld [vmem:[%s0 + $0x70] sm:$0xff]
  %v23 = vld [vmem:[%s0 + $0x78] sm:$0xff]
  %v24 = vld [vmem:[%s0 + $0x80] sm:$0xff]
  %v25 = vld [vmem:[%s0 + $0x88] sm:$0xff]
  %v26 = vld [vmem:[%s0 + $0x90] sm:$0xff]
  %v27 = vld [vmem:[%s0 + $0x98] sm:$0xff]
  %v28 = vld [vmem:[%s0 + $0xa0] sm:$0xff]
  %v29 = vld [vmem:[%s0 + $0xa8] sm:$0xff]
  %v30 = vld [vmem:[%s0 + $0xb0] sm:$0xff]
  %v31 = vld [vmem:[%s0 + $0xb8] sm:$0xff]
  %v32 = vld [vmem:[%s0 + $0xc0] sm:$0xff]
  %v33 = vld [vmem:[%s0 + $0xc8] sm:$0xff]
  %v34 = vld [vmem:[%s0 + $0xd0] sm:$0xff]
  %v35 = vld [vmem:[%s0 + $0xd8] sm:$0xff]
  %v36 = vld [vmem:[%s0 + $0xe0] sm:$0xff]
  %v37 = vld [vmem:[%s0 + $0xe8] sm:$0xff]
  %v38 = vld [vmem:[%s0 + $0xf0] sm:$0xff]
  %v39 = vld [vmem:[%s0 + $0xf8] sm:$0xff]
  %v40 = vlaneseq
  %v41 = vshrl.u32 %v40, 7
  %v42 = vadd.s32 %v41, 8
  %v43 = vlaneseq
  %v44 = vand.u32 %v43, 127
  %v45 = vadd.s32 %v44, 128
  %v46 = vadd.s32 %v44, 256
  %v47 = vadd.s32 %v44, 384
  %v48 = vadd.s32 %v44, 512
  %v49 = vadd.s32 %v44, 640
  %v50 = vadd.s32 %v44, 768
  %v51 = vadd.s32 %v44, 896
  %vm52 = vcmp.ge.s32.totalorder %v41, 1
  %vm53 = vcmp.ge.s32.totalorder %v42, 1
  %v54 = vsel %vm52, 1, 0
  %v55 = vsel %vm53, 1, 0
  %v56 = vcvt.s32.f32 %v54
  %v57 = vcvt.s32.f32 %v55
  %vm58 = vcmp.lt.s32.totalorder %v41, 15
  %vm59 = vcmp.lt.s32.totalorder %v42, 15
  %v60 = vsel %vm58, 1, 0
  %v61 = vsel %vm59, 1, 0
  %v62 = vcvt.s32.f32 %v60
  %v63 = vcvt.s32.f32 %v61
  %v64 = vrot.slane %v8, 7
  %v65 = vrot.slane %v9, 7
  %v66 = vrot.slane %v10, 7
  %v67 = vrot.slane %v11, 7
  %v68 = vrot.slane %v12, 7
  %v69 = vrot.slane %v13, 7
  %v70 = vrot.slane %v14, 7
  %v71 = vrot.slane %v15, 7
  %v72 = vrot.slane %v24, 7
  %v73 = vrot.slane %v25, 7
  %v74 = vrot.slane %v26, 7
  %v75 = vrot.slane %v27, 7
  %v76 = vrot.slane %v28, 7
  %v77 = vrot.slane %v29, 7
  %v78 = vrot.slane %v30, 7
  %v79 = vrot.slane %v31, 7
  %v80 = vrot.slane %v16, 7
  %v81 = vrot.slane %v17, 7
  %v82 = vrot.slane %v18, 7
  %v83 = vrot.slane %v19, 7
  %v84 = vrot.slane %v20, 7
  %v85 = vrot.slane %v21, 7
  %v86 = vrot.slane %v22, 7
  %v87 = vrot.slane %v23, 7
  %v88 = vrot.slane %v32, 7
  %v89 = vrot.slane %v33, 7
  %v90 = vrot.slane %v34, 7
  %v91 = vrot.slane %v35, 7
  %v92 = vrot.slane %v36, 7
  %v93 = vrot.slane %v37, 7
  %v94 = vrot.slane %v38, 7
  %v95 = vrot.slane %v39, 7
  %vm96 = vcmp.lt.s32.totalorder %v41, 1
  %v97 = vsel %vm96, %v64, %v80
  %v98 = vsel %vm96, %v65, %v81
  %v99 = vsel %vm96, %v66, %v82
  %v100 = vsel %vm96, %v67, %v83
  %v101 = vsel %vm96, %v68, %v84
  %v102 = vsel %vm96, %v69, %v85
  %v103 = vsel %vm96, %v70, %v86
  %v104 = vsel %vm96, %v71, %v87
  %v105 = vsel %vm96, %v72, %v88
  %v106 = vsel %vm96, %v73, %v89
  %v107 = vsel %vm96, %v74, %v90
  %v108 = vsel %vm96, %v75, %v91
  %v109 = vsel %vm96, %v76, %v92
  %v110 = vsel %vm96, %v77, %v93
  %v111 = vsel %vm96, %v78, %v94
  %v112 = vsel %vm96, %v79, %v95
  %v113 = vsel %vm96, %v80, %v64
  %v114 = vsel %vm96, %v81, %v65
  %v115 = vsel %vm96, %v82, %v66
  %v116 = vsel %vm96, %v83, %v67
  %v117 = vsel %vm96, %v84, %v68
  %v118 = vsel %vm96, %v85, %v69
  %v119 = vsel %vm96, %v86, %v70
  %v120 = vsel %vm96, %v87, %v71
  %v121 = vsel %vm96, %v88, %v72
  %v122 = vsel %vm96, %v89, %v73
  %v123 = vsel %vm96, %v90, %v74
  %v124 = vsel %vm96, %v91, %v75
  %v125 = vsel %vm96, %v92, %v76
  %v126 = vsel %vm96, %v93, %v77
  %v127 = vsel %vm96, %v94, %v78
  %v128 = vsel %vm96, %v95, %v79
  %v129 = vmul.f32 %v113, %v56
  %v130 = vmul.f32 %v114, %v56
  %v131 = vmul.f32 %v115, %v56
  %v132 = vmul.f32 %v116, %v56
  %v133 = vmul.f32 %v117, %v56
  %v134 = vmul.f32 %v118, %v56
  %v135 = vmul.f32 %v119, %v56
  %v136 = vmul.f32 %v120, %v56
  %v137 = vmul.f32 %v97, %v57
  %v138 = vmul.f32 %v98, %v57
  %v139 = vmul.f32 %v99, %v57
  %v140 = vmul.f32 %v100, %v57
  %v141 = vmul.f32 %v101, %v57
  %v142 = vmul.f32 %v102, %v57
  %v143 = vmul.f32 %v103, %v57
  %v144 = vmul.f32 %v104, %v57
  %v145 = vmul.f32 %v121, %v56
  %v146 = vmul.f32 %v122, %v56
  %v147 = vmul.f32 %v123, %v56
  %v148 = vmul.f32 %v124, %v56
  %v149 = vmul.f32 %v125, %v56
  %v150 = vmul.f32 %v126, %v56
  %v151 = vmul.f32 %v127, %v56
  %v152 = vmul.f32 %v128, %v56
  %v153 = vmul.f32 %v105, %v57
  %v154 = vmul.f32 %v106, %v57
  %v155 = vmul.f32 %v107, %v57
  %v156 = vmul.f32 %v108, %v57
  %v157 = vmul.f32 %v109, %v57
  %v158 = vmul.f32 %v110, %v57
  %v159 = vmul.f32 %v111, %v57
  %v160 = vmul.f32 %v112, %v57
  %v161 = vadd.f32 %v8, %v129
  %v162 = vadd.f32 %v9, %v130
  %v163 = vadd.f32 %v10, %v131
  %v164 = vadd.f32 %v11, %v132
  %v165 = vadd.f32 %v12, %v133
  %v166 = vadd.f32 %v13, %v134
  %v167 = vadd.f32 %v14, %v135
  %v168 = vadd.f32 %v15, %v136
  %v169 = vadd.f32 %v16, %v137
  %v170 = vadd.f32 %v17, %v138
  %v171 = vadd.f32 %v18, %v139
  %v172 = vadd.f32 %v19, %v140
  %v173 = vadd.f32 %v20, %v141
  %v174 = vadd.f32 %v21, %v142
  %v175 = vadd.f32 %v22, %v143
  %v176 = vadd.f32 %v23, %v144
  %v177 = vadd.f32 %v24, %v145
  %v178 = vadd.f32 %v25, %v146
  %v179 = vadd.f32 %v26, %v147
  %v180 = vadd.f32 %v27, %v148
  %v181 = vadd.f32 %v28, %v149
  %v182 = vadd.f32 %v29, %v150
  %v183 = vadd.f32 %v30, %v151
  %v184 = vadd.f32 %v31, %v152
  %v185 = vadd.f32 %v32, %v153
  %v186 = vadd.f32 %v33, %v154
  %v187 = vadd.f32 %v34, %v155
  %v188 = vadd.f32 %v35, %v156
  %v189 = vadd.f32 %v36, %v157
  %v190 = vadd.f32 %v37, %v158
  %v191 = vadd.f32 %v38, %v159
  %v192 = vadd.f32 %v39, %v160
  %v193 = vrot.slane %v8, 1
  %v194 = vrot.slane %v9, 1
  %v195 = vrot.slane %v10, 1
  %v196 = vrot.slane %v11, 1
  %v197 = vrot.slane %v12, 1
  %v198 = vrot.slane %v13, 1
  %v199 = vrot.slane %v14, 1
  %v200 = vrot.slane %v15, 1
  %v201 = vrot.slane %v24, 1
  %v202 = vrot.slane %v25, 1
  %v203 = vrot.slane %v26, 1
  %v204 = vrot.slane %v27, 1
  %v205 = vrot.slane %v28, 1
  %v206 = vrot.slane %v29, 1
  %v207 = vrot.slane %v30, 1
  %v208 = vrot.slane %v31, 1
  %v209 = vrot.slane %v16, 1
  %v210 = vrot.slane %v17, 1
  %v211 = vrot.slane %v18, 1
  %v212 = vrot.slane %v19, 1
  %v213 = vrot.slane %v20, 1
  %v214 = vrot.slane %v21, 1
  %v215 = vrot.slane %v22, 1
  %v216 = vrot.slane %v23, 1
  %v217 = vrot.slane %v32, 1
  %v218 = vrot.slane %v33, 1
  %v219 = vrot.slane %v34, 1
  %v220 = vrot.slane %v35, 1
  %v221 = vrot.slane %v36, 1
  %v222 = vrot.slane %v37, 1
  %v223 = vrot.slane %v38, 1
  %v224 = vrot.slane %v39, 1
  %vm225 = vcmp.lt.s32.totalorder %v41, 7
  %v226 = vsel %vm225, %v193, %v209
  %v227 = vsel %vm225, %v194, %v210
  %v228 = vsel %vm225, %v195, %v211
  %v229 = vsel %vm225, %v196, %v212
  %v230 = vsel %vm225, %v197, %v213
  %v231 = vsel %vm225, %v198, %v214
  %v232 = vsel %vm225, %v199, %v215
  %v233 = vsel %vm225, %v200, %v216
  %v234 = vsel %vm225, %v201, %v217
  %v235 = vsel %vm225, %v202, %v218
  %v236 = vsel %vm225, %v203, %v219
  %v237 = vsel %vm225, %v204, %v220
  %v238 = vsel %vm225, %v205, %v221
  %v239 = vsel %vm225, %v206, %v222
  %v240 = vsel %vm225, %v207, %v223
  %v241 = vsel %vm225, %v208, %v224
  %v242 = vsel %vm225, %v209, %v193
  %v243 = vsel %vm225, %v210, %v194
  %v244 = vsel %vm225, %v211, %v195
  %v245 = vsel %vm225, %v212, %v196
  %v246 = vsel %vm225, %v213, %v197
  %v247 = vsel %vm225, %v214, %v198
  %v248 = vsel %vm225, %v215, %v199
  %v249 = vsel %vm225, %v216, %v200
  %v250 = vsel %vm225, %v217, %v201
  %v251 = vsel %vm225, %v218, %v202
  %v252 = vsel %vm225, %v219, %v203
  %v253 = vsel %vm225, %v220, %v204
  %v254 = vsel %vm225, %v221, %v205
  %v255 = vsel %vm225, %v222, %v206
  %v256 = vsel %vm225, %v223, %v207
  %v257 = vsel %vm225, %v224, %v208
  %v258 = vmul.f32 %v226, %v62
  %v259 = vmul.f32 %v227, %v62
  %v260 = vmul.f32 %v228, %v62
  %v261 = vmul.f32 %v229, %v62
  %v262 = vmul.f32 %v230, %v62
  %v263 = vmul.f32 %v231, %v62
  %v264 = vmul.f32 %v232, %v62
  %v265 = vmul.f32 %v233, %v62
  %v266 = vmul.f32 %v242, %v63
  %v267 = vmul.f32 %v243, %v63
  %v268 = vmul.f32 %v244, %v63
  %v269 = vmul.f32 %v245, %v63
  %v270 = vmul.f32 %v246, %v63
  %v271 = vmul.f32 %v247, %v63
  %v272 = vmul.f32 %v248, %v63
  %v273 = vmul.f32 %v249, %v63
  %v274 = vmul.f32 %v234, %v62
  %v275 = vmul.f32 %v235, %v62
  %v276 = vmul.f32 %v236, %v62
  %v277 = vmul.f32 %v237, %v62
  %v278 = vmul.f32 %v238, %v62
  %v279 = vmul.f32 %v239, %v62
  %v280 = vmul.f32 %v240, %v62
  %v281 = vmul.f32 %v241, %v62
  %v282 = vmul.f32 %v250, %v63
  %v283 = vmul.f32 %v251, %v63
  %v284 = vmul.f32 %v252, %v63
  %v285 = vmul.f32 %v253, %v63
  %v286 = vmul.f32 %v254, %v63
  %v287 = vmul.f32 %v255, %v63
  %v288 = vmul.f32 %v256, %v63
  %v289 = vmul.f32 %v257, %v63
  %v290 = vadd.f32 %v161, %v258
  %v291 = vadd.f32 %v162, %v259
  %v292 = vadd.f32 %v163, %v260
  %v293 = vadd.f32 %v164, %v261
  %v294 = vadd.f32 %v165, %v262
  %v295 = vadd.f32 %v166, %v263
  %v296 = vadd.f32 %v167, %v264
  %v297 = vadd.f32 %v168, %v265
  %v298 = vadd.f32 %v169, %v266
  %v299 = vadd.f32 %v170, %v267
  %v300 = vadd.f32 %v171, %v268
  %v301 = vadd.f32 %v172, %v269
  %v302 = vadd.f32 %v173, %v270
  %v303 = vadd.f32 %v174, %v271
  %v304 = vadd.f32 %v175, %v272
  %v305 = vadd.f32 %v176, %v273
  %v306 = vadd.f32 %v177, %v274
  %v307 = vadd.f32 %v178, %v275
  %v308 = vadd.f32 %v179, %v276
  %v309 = vadd.f32 %v180, %v277
  %v310 = vadd.f32 %v181, %v278
  %v311 = vadd.f32 %v182, %v279
  %v312 = vadd.f32 %v183, %v280
  %v313 = vadd.f32 %v184, %v281
  %v314 = vadd.f32 %v185, %v282
  %v315 = vadd.f32 %v186, %v283
  %v316 = vadd.f32 %v187, %v284
  %v317 = vadd.f32 %v188, %v285
  %v318 = vadd.f32 %v189, %v286
  %v319 = vadd.f32 %v190, %v287
  %v320 = vadd.f32 %v191, %v288
  %v321 = vadd.f32 %v192, %v289
  %v322 = vadd.f32 %v56, 1.0
  %v323 = vadd.f32 %v57, 1.0
  %v324 = vadd.f32 %v322, %v62
  %v325 = vadd.f32 %v323, %v63
  %v326 = vrcp.pop %v324
  %v327 = vmul.f32 1.0, %v326
  %v328 = vrcp.pop %v325
  %v329 = vmul.f32 1.0, %v328
  %v330 = vmul.f32 %v290, %v327
  %v331 = vmul.f32 %v291, %v327
  %v332 = vmul.f32 %v292, %v327
  %v333 = vmul.f32 %v293, %v327
  %v334 = vmul.f32 %v294, %v327
  %v335 = vmul.f32 %v295, %v327
  %v336 = vmul.f32 %v296, %v327
  %v337 = vmul.f32 %v297, %v327
  %v338 = vmul.f32 %v298, %v329
  %v339 = vmul.f32 %v299, %v329
  %v340 = vmul.f32 %v300, %v329
  %v341 = vmul.f32 %v301, %v329
  %v342 = vmul.f32 %v302, %v329
  %v343 = vmul.f32 %v303, %v329
  %v344 = vmul.f32 %v304, %v329
  %v345 = vmul.f32 %v305, %v329
  %v346 = vmul.f32 %v306, %v327
  %v347 = vmul.f32 %v307, %v327
  %v348 = vmul.f32 %v308, %v327
  %v349 = vmul.f32 %v309, %v327
  %v350 = vmul.f32 %v310, %v327
  %v351 = vmul.f32 %v311, %v327
  %v352 = vmul.f32 %v312, %v327
  %v353 = vmul.f32 %v313, %v327
  %v354 = vmul.f32 %v314, %v329
  %v355 = vmul.f32 %v315, %v329
  %v356 = vmul.f32 %v316, %v329
  %v357 = vmul.f32 %v317, %v329
  %v358 = vmul.f32 %v318, %v329
  %v359 = vmul.f32 %v319, %v329
  %v360 = vmul.f32 %v320, %v329
  %v361 = vmul.f32 %v321, %v329
  %vm362 = vcmp.ge.s32.totalorder %v44, 64
  %vm363 = vcmp.ge.s32.totalorder %v45, 64
  %vm364 = vcmp.ge.s32.totalorder %v46, 64
  %vm365 = vcmp.ge.s32.totalorder %v47, 64
  %vm366 = vcmp.ge.s32.totalorder %v48, 64
  %vm367 = vcmp.ge.s32.totalorder %v49, 64
  %vm368 = vcmp.ge.s32.totalorder %v50, 64
  %vm369 = vcmp.ge.s32.totalorder %v51, 64
  %v370 = vsel %vm362, 1, 0
  %v371 = vsel %vm363, 1, 0
  %v372 = vsel %vm364, 1, 0
  %v373 = vsel %vm365, 1, 0
  %v374 = vsel %vm366, 1, 0
  %v375 = vsel %vm367, 1, 0
  %v376 = vsel %vm368, 1, 0
  %v377 = vsel %vm369, 1, 0
  %v378 = vcvt.s32.f32 %v370
  %v379 = vcvt.s32.f32 %v371
  %v380 = vcvt.s32.f32 %v372
  %v381 = vcvt.s32.f32 %v373
  %v382 = vcvt.s32.f32 %v374
  %v383 = vcvt.s32.f32 %v375
  %v384 = vcvt.s32.f32 %v376
  %v385 = vcvt.s32.f32 %v377
  %vm386 = vcmp.lt.s32.totalorder %v44, 960
  %vm387 = vcmp.lt.s32.totalorder %v45, 960
  %vm388 = vcmp.lt.s32.totalorder %v46, 960
  %vm389 = vcmp.lt.s32.totalorder %v47, 960
  %vm390 = vcmp.lt.s32.totalorder %v48, 960
  %vm391 = vcmp.lt.s32.totalorder %v49, 960
  %vm392 = vcmp.lt.s32.totalorder %v50, 960
  %vm393 = vcmp.lt.s32.totalorder %v51, 960
  %v394 = vsel %vm386, 1, 0
  %v395 = vsel %vm387, 1, 0
  %v396 = vsel %vm388, 1, 0
  %v397 = vsel %vm389, 1, 0
  %v398 = vsel %vm390, 1, 0
  %v399 = vsel %vm391, 1, 0
  %v400 = vsel %vm392, 1, 0
  %v401 = vsel %vm393, 1, 0
  %v402 = vcvt.s32.f32 %v394
  %v403 = vcvt.s32.f32 %v395
  %v404 = vcvt.s32.f32 %v396
  %v405 = vcvt.s32.f32 %v397
  %v406 = vcvt.s32.f32 %v398
  %v407 = vcvt.s32.f32 %v399
  %v408 = vcvt.s32.f32 %v400
  %v409 = vcvt.s32.f32 %v401
  %410 = vrot.lane.b32.xlu0 %v330, 64
  %v411 = vpop.permute.xlu0 %410
  %412 = vrot.lane.b32.xlu0 %v338, 64
  %v413 = vpop.permute.xlu0 %412
  %414 = vrot.lane.b32.xlu0 %v346, 64
  %v415 = vpop.permute.xlu0 %414
  %416 = vrot.lane.b32.xlu0 %v354, 64
  %v417 = vpop.permute.xlu0 %416
  %418 = vrot.lane.b32.xlu0 %v331, 64
  %v419 = vpop.permute.xlu0 %418
  %420 = vrot.lane.b32.xlu0 %v339, 64
  %v421 = vpop.permute.xlu0 %420
  %422 = vrot.lane.b32.xlu0 %v347, 64
  %v423 = vpop.permute.xlu0 %422
  %424 = vrot.lane.b32.xlu0 %v355, 64
  %v425 = vpop.permute.xlu0 %424
  %426 = vrot.lane.b32.xlu0 %v332, 64
  %v427 = vpop.permute.xlu0 %426
  %428 = vrot.lane.b32.xlu0 %v340, 64
  %v429 = vpop.permute.xlu0 %428
  %430 = vrot.lane.b32.xlu0 %v348, 64
  %v431 = vpop.permute.xlu0 %430
  %432 = vrot.lane.b32.xlu0 %v356, 64
  %v433 = vpop.permute.xlu0 %432
  %434 = vrot.lane.b32.xlu0 %v333, 64
  %v435 = vpop.permute.xlu0 %434
  %436 = vrot.lane.b32.xlu0 %v341, 64
  %v437 = vpop.permute.xlu0 %436
  %438 = vrot.lane.b32.xlu0 %v349, 64
  %v439 = vpop.permute.xlu0 %438
  %440 = vrot.lane.b32.xlu0 %v357, 64
  %v441 = vpop.permute.xlu0 %440
  %442 = vrot.lane.b32.xlu0 %v334, 64
  %v443 = vpop.permute.xlu0 %442
  %444 = vrot.lane.b32.xlu0 %v342, 64
  %v445 = vpop.permute.xlu0 %444
  %446 = vrot.lane.b32.xlu0 %v350, 64
  %v447 = vpop.permute.xlu0 %446
  %448 = vrot.lane.b32.xlu0 %v358, 64
  %v449 = vpop.permute.xlu0 %448
  %450 = vrot.lane.b32.xlu0 %v335, 64
  %v451 = vpop.permute.xlu0 %450
  %452 = vrot.lane.b32.xlu0 %v343, 64
  %v453 = vpop.permute.xlu0 %452
  %454 = vrot.lane.b32.xlu0 %v351, 64
  %v455 = vpop.permute.xlu0 %454
  %456 = vrot.lane.b32.xlu0 %v359, 64
  %v457 = vpop.permute.xlu0 %456
  %458 = vrot.lane.b32.xlu0 %v336, 64
  %v459 = vpop.permute.xlu0 %458
  %460 = vrot.lane.b32.xlu0 %v344, 64
  %v461 = vpop.permute.xlu0 %460
  %462 = vrot.lane.b32.xlu0 %v352, 64
  %v463 = vpop.permute.xlu0 %462
  %464 = vrot.lane.b32.xlu0 %v360, 64
  %v465 = vpop.permute.xlu0 %464
  %466 = vrot.lane.b32.xlu0 %v337, 64
  %v467 = vpop.permute.xlu0 %466
  %468 = vrot.lane.b32.xlu0 %v345, 64
  %v469 = vpop.permute.xlu0 %468
  %470 = vrot.lane.b32.xlu0 %v353, 64
  %v471 = vpop.permute.xlu0 %470
  %472 = vrot.lane.b32.xlu0 %v361, 64
  %v473 = vpop.permute.xlu0 %472
  %vm474 = vcmp.lt.s32.totalorder %v44, 64
  %v475 = vsel %vm474, %v459, %v467
  %v476 = vsel %vm474, %v461, %v469
  %v477 = vsel %vm474, %v463, %v471
  %v478 = vsel %vm474, %v465, %v473
  %v479 = vsel %vm474, %v451, %v459
  %v480 = vsel %vm474, %v453, %v461
  %v481 = vsel %vm474, %v455, %v463
  %v482 = vsel %vm474, %v457, %v465
  %v483 = vsel %vm474, %v443, %v451
  %v484 = vsel %vm474, %v445, %v453
  %v485 = vsel %vm474, %v447, %v455
  %v486 = vsel %vm474, %v449, %v457
  %v487 = vsel %vm474, %v435, %v443
  %v488 = vsel %vm474, %v437, %v445
  %v489 = vsel %vm474, %v439, %v447
  %v490 = vsel %vm474, %v441, %v449
  %v491 = vsel %vm474, %v427, %v435
  %v492 = vsel %vm474, %v429, %v437
  %v493 = vsel %vm474, %v431, %v439
  %v494 = vsel %vm474, %v433, %v441
  %v495 = vsel %vm474, %v419, %v427
  %v496 = vsel %vm474, %v421, %v429
  %v497 = vsel %vm474, %v423, %v431
  %v498 = vsel %vm474, %v425, %v433
  %v499 = vsel %vm474, %v411, %v419
  %v500 = vsel %vm474, %v413, %v421
  %v501 = vsel %vm474, %v415, %v423
  %v502 = vsel %vm474, %v417, %v425
  %v503 = vsel %vm474, %v467, %v411
  %v504 = vsel %vm474, %v469, %v413
  %v505 = vsel %vm474, %v471, %v415
  %v506 = vsel %vm474, %v473, %v417
  %v507 = vmul.f32 %v503, %v378
  %v508 = vmul.f32 %v499, %v379
  %v509 = vmul.f32 %v495, %v380
  %v510 = vmul.f32 %v491, %v381
  %v511 = vmul.f32 %v487, %v382
  %v512 = vmul.f32 %v483, %v383
  %v513 = vmul.f32 %v479, %v384
  %v514 = vmul.f32 %v475, %v385
  %v515 = vmul.f32 %v504, %v378
  %v516 = vmul.f32 %v500, %v379
  %v517 = vmul.f32 %v496, %v380
  %v518 = vmul.f32 %v492, %v381
  %v519 = vmul.f32 %v488, %v382
  %v520 = vmul.f32 %v484, %v383
  %v521 = vmul.f32 %v480, %v384
  %v522 = vmul.f32 %v476, %v385
  %v523 = vmul.f32 %v505, %v378
  %v524 = vmul.f32 %v501, %v379
  %v525 = vmul.f32 %v497, %v380
  %v526 = vmul.f32 %v493, %v381
  %v527 = vmul.f32 %v489, %v382
  %v528 = vmul.f32 %v485, %v383
  %v529 = vmul.f32 %v481, %v384
  %v530 = vmul.f32 %v477, %v385
  %v531 = vmul.f32 %v506, %v378
  %v532 = vmul.f32 %v502, %v379
  %v533 = vmul.f32 %v498, %v380
  %v534 = vmul.f32 %v494, %v381
  %v535 = vmul.f32 %v490, %v382
  %v536 = vmul.f32 %v486, %v383
  %v537 = vmul.f32 %v482, %v384
  %v538 = vmul.f32 %v478, %v385
  %v539 = vadd.f32 %v330, %v507
  %v540 = vadd.f32 %v331, %v508
  %v541 = vadd.f32 %v332, %v509
  %v542 = vadd.f32 %v333, %v510
  %v543 = vadd.f32 %v334, %v511
  %v544 = vadd.f32 %v335, %v512
  %v545 = vadd.f32 %v336, %v513
  %v546 = vadd.f32 %v337, %v514
  %v547 = vadd.f32 %v338, %v515
  %v548 = vadd.f32 %v339, %v516
  %v549 = vadd.f32 %v340, %v517
  %v550 = vadd.f32 %v341, %v518
  %v551 = vadd.f32 %v342, %v519
  %v552 = vadd.f32 %v343, %v520
  %v553 = vadd.f32 %v344, %v521
  %v554 = vadd.f32 %v345, %v522
  %v555 = vadd.f32 %v346, %v523
  %v556 = vadd.f32 %v347, %v524
  %v557 = vadd.f32 %v348, %v525
  %v558 = vadd.f32 %v349, %v526
  %v559 = vadd.f32 %v350, %v527
  %v560 = vadd.f32 %v351, %v528
  %v561 = vadd.f32 %v352, %v529
  %v562 = vadd.f32 %v353, %v530
  %v563 = vadd.f32 %v354, %v531
  %v564 = vadd.f32 %v355, %v532
  %v565 = vadd.f32 %v356, %v533
  %v566 = vadd.f32 %v357, %v534
  %v567 = vadd.f32 %v358, %v535
  %v568 = vadd.f32 %v359, %v536
  %v569 = vadd.f32 %v360, %v537
  %v570 = vadd.f32 %v361, %v538
  %v571 = vmul.f32 %v499, %v402
  %v572 = vmul.f32 %v495, %v403
  %v573 = vmul.f32 %v491, %v404
  %v574 = vmul.f32 %v487, %v405
  %v575 = vmul.f32 %v483, %v406
  %v576 = vmul.f32 %v479, %v407
  %v577 = vmul.f32 %v475, %v408
  %v578 = vmul.f32 %v503, %v409
  %v579 = vmul.f32 %v500, %v402
  %v580 = vmul.f32 %v496, %v403
  %v581 = vmul.f32 %v492, %v404
  %v582 = vmul.f32 %v488, %v405
  %v583 = vmul.f32 %v484, %v406
  %v584 = vmul.f32 %v480, %v407
  %v585 = vmul.f32 %v476, %v408
  %v586 = vmul.f32 %v504, %v409
  %v587 = vmul.f32 %v501, %v402
  %v588 = vmul.f32 %v497, %v403
  %v589 = vmul.f32 %v493, %v404
  %v590 = vmul.f32 %v489, %v405
  %v591 = vmul.f32 %v485, %v406
  %v592 = vmul.f32 %v481, %v407
  %v593 = vmul.f32 %v477, %v408
  %v594 = vmul.f32 %v505, %v409
  %v595 = vmul.f32 %v502, %v402
  %v596 = vmul.f32 %v498, %v403
  %v597 = vmul.f32 %v494, %v404
  %v598 = vmul.f32 %v490, %v405
  %v599 = vmul.f32 %v486, %v406
  %v600 = vmul.f32 %v482, %v407
  %v601 = vmul.f32 %v478, %v408
  %v602 = vmul.f32 %v506, %v409
  %v603 = vadd.f32 %v539, %v571
  %v604 = vadd.f32 %v540, %v572
  %v605 = vadd.f32 %v541, %v573
  %v606 = vadd.f32 %v542, %v574
  %v607 = vadd.f32 %v543, %v575
  %v608 = vadd.f32 %v544, %v576
  %v609 = vadd.f32 %v545, %v577
  %v610 = vadd.f32 %v546, %v578
  %v611 = vadd.f32 %v547, %v579
  %v612 = vadd.f32 %v548, %v580
  %v613 = vadd.f32 %v549, %v581
  %v614 = vadd.f32 %v550, %v582
  %v615 = vadd.f32 %v551, %v583
  %v616 = vadd.f32 %v552, %v584
  %v617 = vadd.f32 %v553, %v585
  %v618 = vadd.f32 %v554, %v586
  %v619 = vadd.f32 %v555, %v587
  %v620 = vadd.f32 %v556, %v588
  %v621 = vadd.f32 %v557, %v589
  %v622 = vadd.f32 %v558, %v590
  %v623 = vadd.f32 %v559, %v591
  %v624 = vadd.f32 %v560, %v592
  %v625 = vadd.f32 %v561, %v593
  %v626 = vadd.f32 %v562, %v594
  %v627 = vadd.f32 %v563, %v595
  %v628 = vadd.f32 %v564, %v596
  %v629 = vadd.f32 %v565, %v597
  %v630 = vadd.f32 %v566, %v598
  %v631 = vadd.f32 %v567, %v599
  %v632 = vadd.f32 %v568, %v600
  %v633 = vadd.f32 %v569, %v601
  %v634 = vadd.f32 %v570, %v602
  %v635 = vadd.f32 %v378, 1.0
  %v636 = vadd.f32 %v379, 1.0
  %v637 = vadd.f32 %v380, 1.0
  %v638 = vadd.f32 %v381, 1.0
  %v639 = vadd.f32 %v382, 1.0
  %v640 = vadd.f32 %v383, 1.0
  %v641 = vadd.f32 %v384, 1.0
  %v642 = vadd.f32 %v385, 1.0
  %v643 = vadd.f32 %v635, %v402
  %v644 = vadd.f32 %v636, %v403
  %v645 = vadd.f32 %v637, %v404
  %v646 = vadd.f32 %v638, %v405
  %v647 = vadd.f32 %v639, %v406
  %v648 = vadd.f32 %v640, %v407
  %v649 = vadd.f32 %v641, %v408
  %v650 = vadd.f32 %v642, %v409
  %v651 = vrcp.pop %v643
  %v652 = vmul.f32 1.0, %v651
  %v653 = vrcp.pop %v644
  %v654 = vmul.f32 1.0, %v653
  %v655 = vrcp.pop %v645
  %v656 = vmul.f32 1.0, %v655
  %v657 = vrcp.pop %v646
  %v658 = vmul.f32 1.0, %v657
  %v659 = vrcp.pop %v647
  %v660 = vmul.f32 1.0, %v659
  %v661 = vrcp.pop %v648
  %v662 = vmul.f32 1.0, %v661
  %v663 = vrcp.pop %v649
  %v664 = vmul.f32 1.0, %v663
  %v665 = vrcp.pop %v650
  %v666 = vmul.f32 1.0, %v665
  %v667 = vmul.f32 %v603, %v652
  %v668 = vmul.f32 %v604, %v654
  %v669 = vmul.f32 %v605, %v656
  %v670 = vmul.f32 %v606, %v658
  %v671 = vmul.f32 %v607, %v660
  %v672 = vmul.f32 %v608, %v662
  %v673 = vmul.f32 %v609, %v664
  %v674 = vmul.f32 %v610, %v666
  %v675 = vmul.f32 %v611, %v652
  %v676 = vmul.f32 %v612, %v654
  %v677 = vmul.f32 %v613, %v656
  %v678 = vmul.f32 %v614, %v658
  %v679 = vmul.f32 %v615, %v660
  %v680 = vmul.f32 %v616, %v662
  %v681 = vmul.f32 %v617, %v664
  %v682 = vmul.f32 %v618, %v666
  %v683 = vmul.f32 %v619, %v652
  %v684 = vmul.f32 %v620, %v654
  %v685 = vmul.f32 %v621, %v656
  %v686 = vmul.f32 %v622, %v658
  %v687 = vmul.f32 %v623, %v660
  %v688 = vmul.f32 %v624, %v662
  %v689 = vmul.f32 %v625, %v664
  %v690 = vmul.f32 %v626, %v666
  %v691 = vmul.f32 %v627, %v652
  %v692 = vmul.f32 %v628, %v654
  %v693 = vmul.f32 %v629, %v656
  %v694 = vmul.f32 %v630, %v658
  %v695 = vmul.f32 %v631, %v660
  %v696 = vmul.f32 %v632, %v662
  %v697 = vmul.f32 %v633, %v664
  %v698 = vmul.f32 %v634, %v666
  %v699 = vsub.f32 %v667, %v8
  %v700 = vsub.f32 %v668, %v9
  %v701 = vsub.f32 %v669, %v10
  %v702 = vsub.f32 %v670, %v11
  %v703 = vsub.f32 %v671, %v12
  %v704 = vsub.f32 %v672, %v13
  %v705 = vsub.f32 %v673, %v14
  %v706 = vsub.f32 %v674, %v15
  %v707 = vsub.f32 %v675, %v16
  %v708 = vsub.f32 %v676, %v17
  %v709 = vsub.f32 %v677, %v18
  %v710 = vsub.f32 %v678, %v19
  %v711 = vsub.f32 %v679, %v20
  %v712 = vsub.f32 %v680, %v21
  %v713 = vsub.f32 %v681, %v22
  %v714 = vsub.f32 %v682, %v23
  %v715 = vsub.f32 %v683, %v24
  %v716 = vsub.f32 %v684, %v25
  %v717 = vsub.f32 %v685, %v26
  %v718 = vsub.f32 %v686, %v27
  %v719 = vsub.f32 %v687, %v28
  %v720 = vsub.f32 %v688, %v29
  %v721 = vsub.f32 %v689, %v30
  %v722 = vsub.f32 %v690, %v31
  %v723 = vsub.f32 %v691, %v32
  %v724 = vsub.f32 %v692, %v33
  %v725 = vsub.f32 %v693, %v34
  %v726 = vsub.f32 %v694, %v35
  %v727 = vsub.f32 %v695, %v36
  %v728 = vsub.f32 %v696, %v37
  %v729 = vsub.f32 %v697, %v38
  %v730 = vsub.f32 %v698, %v39
  %731 = vst [vmem:[%s1] sm:$0xff] %v699
  %732 = vst [vmem:[%s1 + $0x8] sm:$0xff] %v700
  %733 = vst [vmem:[%s1 + $0x10] sm:$0xff] %v701
  %734 = vst [vmem:[%s1 + $0x18] sm:$0xff] %v702
  %735 = vst [vmem:[%s1 + $0x20] sm:$0xff] %v703
  %736 = vst [vmem:[%s1 + $0x28] sm:$0xff] %v704
  %737 = vst [vmem:[%s1 + $0x30] sm:$0xff] %v705
  %738 = vst [vmem:[%s1 + $0x38] sm:$0xff] %v706
  %739 = vst [vmem:[%s1 + $0x40] sm:$0xff] %v707
  %740 = vst [vmem:[%s1 + $0x48] sm:$0xff] %v708
  %741 = vst [vmem:[%s1 + $0x50] sm:$0xff] %v709
  %742 = vst [vmem:[%s1 + $0x58] sm:$0xff] %v710
  %743 = vst [vmem:[%s1 + $0x60] sm:$0xff] %v711
  %744 = vst [vmem:[%s1 + $0x68] sm:$0xff] %v712
  %745 = vst [vmem:[%s1 + $0x70] sm:$0xff] %v713
  %746 = vst [vmem:[%s1 + $0x78] sm:$0xff] %v714
  %747 = vst [vmem:[%s1 + $0x80] sm:$0xff] %v715
  %748 = vst [vmem:[%s1 + $0x88] sm:$0xff] %v716
  %749 = vst [vmem:[%s1 + $0x90] sm:$0xff] %v717
  %750 = vst [vmem:[%s1 + $0x98] sm:$0xff] %v718
  %751 = vst [vmem:[%s1 + $0xa0] sm:$0xff] %v719
  %752 = vst [vmem:[%s1 + $0xa8] sm:$0xff] %v720
  %753 = vst [vmem:[%s1 + $0xb0] sm:$0xff] %v721
  %754 = vst [vmem:[%s1 + $0xb8] sm:$0xff] %v722
  %755 = vst [vmem:[%s1 + $0xc0] sm:$0xff] %v723
  %756 = vst [vmem:[%s1 + $0xc8] sm:$0xff] %v724
  %757 = vst [vmem:[%s1 + $0xd0] sm:$0xff] %v725
  %758 = vst [vmem:[%s1 + $0xd8] sm:$0xff] %v726
  %759 = vst [vmem:[%s1 + $0xe0] sm:$0xff] %v727
  %760 = vst [vmem:[%s1 + $0xe8] sm:$0xff] %v728
  %761 = vst [vmem:[%s1 + $0xf0] sm:$0xff] %v729
  %762 = vst [vmem:[%s1 + $0xf8] sm:$0xff] %v730
  // Predicated region
  $region6: #{pooling.1} parent=0 // pred_check
    _
  $region7: #{pooling.1} parent=0 // pred_check_branch
    %764 = sbr.rel (0) target = $region9
  $region8: #{pooling.1} parent=0 // pred_region
    _
  $region9: #{pooling.1} parent=0 // pred_fallthru
    _
  // Predicated region
  $region10: #{pooling.1} parent=0 // pred_check
    _
  $region11: #{pooling.1} parent=0 // pred_check_branch
    %766 = sbr.rel (0) target = $region13
  $region12: #{pooling.1} parent=0 // pred_region
    _
  $region13: #{pooling.1} parent=0 // pred_fallthru
    _

</llo_original>
